<compile_context>
chip_gen: v5e
topology: v5e:2x2
jax: 0.10.0
libtpu: 0.0.40
codegen_flags: <defaults>
</compile_context>

<pallas_src>
import functools

import jax
import jax.numpy as jnp
import numpy as np
from jax.experimental import pallas as pl
from jax.experimental.pallas import tpu as pltpu

EPS = 0.001


# -----------------------------------------------------------------------------
# Small helpers
# -----------------------------------------------------------------------------
def _round_up(x, m):
    return ((x + m - 1) // m) * m


def _sublanes(itemsize):
    # Rows per vreg tile for this dtype (sub-32-bit dtypes pack along sublanes).
    return max(8, 32 // itemsize)


def _vmem_capacity_bytes():
    """Per-core VMEM capacity; conservative fallback if the query fails."""
    cap = None
    try:
        cap = getattr(pltpu.get_tpu_info(), "vmem_capacity_bytes", None)
    except Exception:
        cap = None
    if not cap:
        cap = 64 * 1024 * 1024          # v7x-safe default
    return int(min(max(int(cap), 32 * 1024 * 1024), 128 * 1024 * 1024))


def _pick_lane_tile(L, max_lanes):
    """Lane tile: multiple of 128. Covers L in one tile if possible, else prefers
    an exact divisor of L (no ragged tail) when it is not much smaller than the
    budget, else uses the full budget with a masked ragged tail."""
    max_lanes = max(128, (int(max_lanes) // 128) * 128)
    L128 = _round_up(L, 128)
    if L128 <= max_lanes:
        return L128
    best_div = 0
    t = 128
    while t <= max_lanes:
        if L % t == 0:
            best_div = t
        t += 128
    if best_div >= max_lanes // 2:
        return best_div
    return max_lanes


def _pick_batch_fold(N, C, sublanes):
    """Fold k batch entries into the channel-row dim (N,C,HW)->(N//k,k*C,HW) when
    C is smaller than the sublane count, so rows aren't mostly padding."""
    max_k = max(1, sublanes // max(C, 1))
    k = 1
    for cand in range(1, max_k + 1):
        if N % cand == 0:
            k = cand
    return k


# -----------------------------------------------------------------------------
# Kernels
# -----------------------------------------------------------------------------
def _fused_kernel(x_ref, g_ref, b_ref, a_ref, o_ref, *, n_batch, count, eps):
    """Whole activation resident in VMEM: batch stats + BN + PReLU in one pass
    over HBM (1 read + 1 write)."""
    c = x_ref.shape[1]
    s = jnp.zeros((c, 1), jnp.float32)
    sq = jnp.zeros((c, 1), jnp.float32)
    for i in range(n_batch):                      # static unroll; fused path is small
        xi = x_ref[i].astype(jnp.float32)         # (C, HW)
        s = s + jnp.sum(xi, axis=1, keepdims=True)
        sq = sq + jnp.sum(xi * xi, axis=1, keepdims=True)
    inv = 1.0 / count
    mean = s * inv
    var = jnp.maximum(sq * inv - mean * mean, 0.0)
    scale = g_ref[...] * jax.lax.rsqrt(var + eps)  # (C, 1)
    bias = b_ref[...] - mean * scale
    alpha = a_ref[...]
    for i in range(n_batch):
        y = x_ref[i].astype(jnp.float32) * scale + bias
        o_ref[i] = jnp.where(y >= 0.0, y, alpha * y).astype(o_ref.dtype)


def _partial_stats_kernel(x_ref, psum_ref, psumsq_ref, *, hw, tl, need_mask):
    """Per-(batch-chunk, lane-tile) partial sum / sumsq. Fully parallel grid:
    each step writes its own tiny (R, 1) output block (no shared accumulator)."""
    x = x_ref[...].astype(jnp.float32)            # (R, TL)
    if need_mask:                                 # ragged HW tail: zero padded lanes
        l = pl.program_id(1)
        lane = jax.lax.broadcasted_iota(jnp.int32, x.shape, 1)
        x = jnp.where(lane < (hw - l * tl), x, 0.0)
    psum_ref[...] = jnp.sum(x, axis=1, keepdims=True)
    psumsq_ref[...] = jnp.sum(x * x, axis=1, keepdims=True)


def _apply_kernel(x_ref, scale_ref, bias_ref, alpha_ref, o_ref):
    """Per-tile folded-BN affine + per-channel PReLU (lane-dense (R, TL) tiles)."""
    x = x_ref[...].astype(jnp.float32)
    y = x * scale_ref[...] + bias_ref[...]
    o_ref[...] = jnp.where(y >= 0.0, y, alpha_ref[...] * y).astype(o_ref.dtype)


# -----------------------------------------------------------------------------
# Wrapper
# -----------------------------------------------------------------------------
def bn_prelu(x_nchw, gamma, beta, alpha, *, force_tiled=False, max_tile_bytes=None):
    """x_nchw: (N, C, H, W). gamma/beta/alpha: (C,). Returns (N, C, H, W).

    `force_tiled` / `max_tile_bytes` exist to exercise the tiled path and
    multi-tile grids at small test shapes (and for manual tuning)."""
    N, C, H, W = x_nchw.shape
    HW = H * W
    itemsize = x_nchw.dtype.itemsize
    sub = _sublanes(itemsize)

    x3 = x_nchw.reshape(N, C, HW)                 # pure view of NCHW memory

    g32 = gamma.astype(jnp.float32)
    b32 = beta.astype(jnp.float32)
    a32 = alpha.astype(jnp.float32)
    count = float(N * HW)

    vmem_cap = _vmem_capacity_bytes()             # generation-aware (64 MiB on v7x)
    vmem_limit = int(0.85 * vmem_cap)

    # ---- Fused single-pass fast path (activation VMEM-resident) -------------
    hw_pad = _round_up(HW, 128)
    fused_bytes = N * hw_pad * (_round_up(C, sub) * itemsize * 2     # in + out
                                + _round_up(C, 8) * 4 * 2)           # f32 working set
    if (not force_tiled) and fused_bytes <= int(0.45 * vmem_cap):
        out3 = pl.pallas_call(
            functools.partial(_fused_kernel, n_batch=N, count=count, eps=EPS),
            out_shape=jax.ShapeDtypeStruct((N, C, HW), x_nchw.dtype),
            compiler_params=pltpu.CompilerParams(vmem_limit_bytes=vmem_limit),
        )(x3, g32.reshape(C, 1), b32.reshape(C, 1), a32.reshape(C, 1))
        return out3.reshape(N, C, H, W)

    # ---- Tiled two-pass path -------------------------------------------------
    # Fold small C into the sublane dim: (N, C, HW) -> (Ng, R, HW), R = k*C.
    k = _pick_batch_fold(N, C, sub)
    Ng, R = N // k, k * C
    xf = x3.reshape(Ng, R, HW)                    # still a pure view

    r_pad_in = _round_up(R, sub)                  # padded rows as stored in VMEM
    r_pad_f32 = _round_up(R, 8)
    budget = int(0.6 * vmem_cap)                  # total pipeline-buffer budget

    # Bytes of live VMEM per lane of tile:
    #   stats: 2 input buffers + ~2 f32 temps;  apply: 2 in + 2 out + ~2 f32 temps.
    stats_lane_bytes = r_pad_in * itemsize * 2 + r_pad_f32 * 4 * 2
    apply_lane_bytes = r_pad_in * itemsize * 4 + r_pad_f32 * 4 * 2
    stats_cap = 16 * 2**20 if max_tile_bytes is None else int(max_tile_bytes)
    apply_cap = 8 * 2**20 if max_tile_bytes is None else int(max_tile_bytes)
    max_lanes_stats = min(budget // stats_lane_bytes,
                          max(1, stats_cap // (r_pad_in * itemsize)))
    max_lanes_apply = min(budget // apply_lane_bytes,
                          max(1, apply_cap // (r_pad_in * itemsize)))
    tl_stats = _pick_lane_tile(HW, max_lanes_stats)
    tl_apply = _pick_lane_tile(HW, max_lanes_apply)
    n_ls = pl.cdiv(HW, tl_stats)
    n_la = pl.cdiv(HW, tl_apply)

    # ---- Pass 1: per-chunk partial sums (fully parallel grid) ----------------
    x_stats_spec = pl.BlockSpec((pl.Squeezed(), R, tl_stats), lambda n, l: (n, 0, l))
    part_spec = pl.BlockSpec((pl.Squeezed(), R, 1),
                             lambda n, l: (n * n_ls + l, 0, 0))
    psum, psumsq = pl.pallas_call(
        functools.partial(_partial_stats_kernel, hw=HW, tl=tl_stats,
                          need_mask=(HW % tl_stats != 0)),
        out_shape=(jax.ShapeDtypeStruct((Ng * n_ls, R, 1), jnp.float32),
                   jax.ShapeDtypeStruct((Ng * n_ls, R, 1), jnp.float32)),
        grid=(Ng, n_ls),
        in_specs=[x_stats_spec],
        out_specs=(part_spec, part_spec),
        compiler_params=pltpu.CompilerParams(
            dimension_semantics=("parallel", "parallel"),
            vmem_limit_bytes=vmem_limit),
    )(xf)

    # ---- Finalize (tiny, plain JAX): fold BN into per-channel affine ---------
    tot = jnp.sum(psum.reshape(-1, k, C), axis=(0, 1))        # (C,)
    totsq = jnp.sum(psumsq.reshape(-1, k, C), axis=(0, 1))
    mean = tot / count
    var = jnp.maximum(totsq / count - mean * mean, 0.0)       # biased variance
    scale_c = g32 * jax.lax.rsqrt(var + EPS)
    bias_c = b32 - mean * scale_c
    scale_r = jnp.tile(scale_c, (k,)).reshape(R, 1)           # per folded row
    bias_r = jnp.tile(bias_c, (k,)).reshape(R, 1)
    alpha_r = jnp.tile(a32, (k,)).reshape(R, 1)

    # ---- Pass 2: normalize + PReLU, fully parallel ---------------------------
    x_apply_spec = pl.BlockSpec((pl.Squeezed(), R, tl_apply), lambda n, l: (n, 0, l))
    param_spec = pl.BlockSpec((R, 1), lambda n, l: (0, 0))
    out3 = pl.pallas_call(
        _apply_kernel,
        out_shape=jax.ShapeDtypeStruct((Ng, R, HW), x_nchw.dtype),
        grid=(Ng, n_la),
        in_specs=[x_apply_spec, param_spec, param_spec, param_spec],
        out_specs=x_apply_spec,
        compiler_params=pltpu.CompilerParams(
            dimension_semantics=("parallel", "parallel"),
            vmem_limit_bytes=vmem_limit),
    )(xf, scale_r, bias_r, alpha_r)

    return out3.reshape(N, C, H, W)


# -----------------------------------------------------------------------------
# Reference (pure JAX) for verification
# -----------------------------------------------------------------------------
def _reference(x, gamma, beta, alpha):
    x32 = x.astype(jnp.float32)
    mean = jnp.mean(x32, axis=(0, 2, 3), keepdims=True)
    var = jnp.mean((x32 - mean) ** 2, axis=(0, 2, 3), keepdims=True)
    y = (x32 - mean) * jax.lax.rsqrt(var + EPS)
    y = y * gamma.reshape(1, -1, 1, 1) + beta.reshape(1, -1, 1, 1)
    a = alpha.reshape(1, -1, 1, 1)
    return jnp.where(y >= 0.0, y, a * y).astype(x.dtype)


if __name__ == "__main__":
    key = jax.random.PRNGKey(0)
    kx, kg, kb, ka = jax.random.split(key, 4)

    configs = [
        ((2, 4, 16, 16), {}),                                            # fused fast path
        ((2, 4, 16, 16), {"force_tiled": True}),                         # tiled + batch fold
        ((2, 4, 16, 16), {"force_tiled": True, "max_tile_bytes": 4096}),  # multi lane-tile grid
        ((3, 5, 10, 10), {"force_tiled": True}),                         # ragged HW (<128), masked stats
    ]

    for shape, kwargs in configs:
        N, C, H, W = shape
        x = jax.random.normal(kx, shape, dtype=jnp.float32)
        # Slightly perturbed params (defaults would be 1 / 0 / 0.25) so the
        # affine and PReLU paths are actually exercised.
        gamma = 1.0 + 0.1 * jax.random.normal(kg, (C,), dtype=jnp.float32)
        beta = 0.1 * jax.random.normal(kb, (C,), dtype=jnp.float32)
        alpha = 0.25 + 0.05 * jax.random.normal(ka, (C,), dtype=jnp.float32)

        fn = jax.jit(functools.partial(bn_prelu, **kwargs))
        out = jax.block_until_ready(fn(x, gamma, beta, alpha))
        ref = _reference(x, gamma, beta, alpha)
        np.testing.assert_allclose(np.asarray(out), np.asarray(ref),
                                   rtol=1e-4, atol=1e-5)

    # TODO(synk): PyTorch training-mode BN also updates running_mean/running_var
    # buffers (with unbiased variance) as a side effect; only the forward output
    # is produced here.
    print("KERNEL_OK")
</pallas_src>

<mosaic_0001>
module attributes {stable_mosaic.version = 11 : i64} {
  func.func @_fused_kernel(%arg0: memref<2x4x256xf32, #tpu.memory_space<vmem>>, %arg1: memref<4x1xf32, #tpu.memory_space<vmem>>, %arg2: memref<4x1xf32, #tpu.memory_space<vmem>>, %arg3: memref<4x1xf32, #tpu.memory_space<vmem>>, %arg4: memref<2x4x256xf32, #tpu.memory_space<vmem>>) attributes {dimension_semantics = [], scalar_prefetch = 0 : i64, scratch_operands = 0 : i64, tpu.core_type = #tpu.core_type<tc>} {
    %cst = arith.constant 0.000000e+00 : f32
    %0 = vector.broadcast %cst : f32 to vector<4x1xf32>
    %cst_0 = arith.constant 0.000000e+00 : f32
    %1 = vector.broadcast %cst_0 : f32 to vector<4x1xf32>
    %c0 = arith.constant 0 : index
    %c0_1 = arith.constant 0 : index
    %c0_2 = arith.constant 0 : index
    %2 = vector.load %arg0[%c0, %c0_1, %c0_2] : memref<2x4x256xf32, #tpu.memory_space<vmem>>, vector<1x4x256xf32>
    %3 = vector.shape_cast %2 : vector<1x4x256xf32> to vector<4x256xf32>
    %cst_3 = arith.constant dense<0.000000e+00> : vector<4xf32>
    %4 = vector.multi_reduction <add>, %3, %cst_3 [1] : vector<4x256xf32> to vector<4xf32>
    %5 = vector.shape_cast %4 : vector<4xf32> to vector<4x1xf32>
    %6 = arith.addf %0, %5 : vector<4x1xf32>
    %7 = arith.mulf %3, %3 : vector<4x256xf32>
    %cst_4 = arith.constant dense<0.000000e+00> : vector<4xf32>
    %8 = vector.multi_reduction <add>, %7, %cst_4 [1] : vector<4x256xf32> to vector<4xf32>
    %9 = vector.shape_cast %8 : vector<4xf32> to vector<4x1xf32>
    %10 = arith.addf %1, %9 : vector<4x1xf32>
    %c1 = arith.constant 1 : index
    %c0_5 = arith.constant 0 : index
    %c0_6 = arith.constant 0 : index
    %11 = vector.load %arg0[%c1, %c0_5, %c0_6] : memref<2x4x256xf32, #tpu.memory_space<vmem>>, vector<1x4x256xf32>
    %12 = vector.shape_cast %11 : vector<1x4x256xf32> to vector<4x256xf32>
    %cst_7 = arith.constant dense<0.000000e+00> : vector<4xf32>
    %13 = vector.multi_reduction <add>, %12, %cst_7 [1] : vector<4x256xf32> to vector<4xf32>
    %14 = vector.shape_cast %13 : vector<4xf32> to vector<4x1xf32>
    %15 = arith.addf %6, %14 : vector<4x1xf32>
    %16 = arith.mulf %12, %12 : vector<4x256xf32>
    %cst_8 = arith.constant dense<0.000000e+00> : vector<4xf32>
    %17 = vector.multi_reduction <add>, %16, %cst_8 [1] : vector<4x256xf32> to vector<4xf32>
    %18 = vector.shape_cast %17 : vector<4xf32> to vector<4x1xf32>
    %19 = arith.addf %10, %18 : vector<4x1xf32>
    %cst_9 = arith.constant 0.001953125 : f32
    %20 = vector.broadcast %cst_9 : f32 to vector<4x1xf32>
    %21 = arith.mulf %15, %20 : vector<4x1xf32>
    %cst_10 = arith.constant 0.001953125 : f32
    %22 = vector.broadcast %cst_10 : f32 to vector<4x1xf32>
    %23 = arith.mulf %19, %22 : vector<4x1xf32>
    %24 = arith.mulf %21, %21 : vector<4x1xf32>
    %25 = arith.subf %23, %24 : vector<4x1xf32>
    %cst_11 = arith.constant 0.000000e+00 : f32
    %26 = vector.broadcast %cst_11 : f32 to vector<4x1xf32>
    %27 = arith.maximumf %25, %26 : vector<4x1xf32>
    %c0_12 = arith.constant 0 : index
    %c0_13 = arith.constant 0 : index
    %28 = vector.load %arg1[%c0_12, %c0_13] : memref<4x1xf32, #tpu.memory_space<vmem>>, vector<4x1xf32>
    %cst_14 = arith.constant 1.000000e-03 : f32
    %29 = vector.broadcast %cst_14 : f32 to vector<4x1xf32>
    %30 = arith.addf %27, %29 : vector<4x1xf32>
    %31 = math.rsqrt %30 : vector<4x1xf32>
    %32 = arith.mulf %28, %31 : vector<4x1xf32>
    %c0_15 = arith.constant 0 : index
    %c0_16 = arith.constant 0 : index
    %33 = vector.load %arg2[%c0_15, %c0_16] : memref<4x1xf32, #tpu.memory_space<vmem>>, vector<4x1xf32>
    %34 = arith.mulf %21, %32 : vector<4x1xf32>
    %35 = arith.subf %33, %34 : vector<4x1xf32>
    %c0_17 = arith.constant 0 : index
    %c0_18 = arith.constant 0 : index
    %36 = vector.load %arg3[%c0_17, %c0_18] : memref<4x1xf32, #tpu.memory_space<vmem>>, vector<4x1xf32>
    %c0_19 = arith.constant 0 : index
    %c0_20 = arith.constant 0 : index
    %c0_21 = arith.constant 0 : index
    %37 = vector.load %arg0[%c0_19, %c0_20, %c0_21] : memref<2x4x256xf32, #tpu.memory_space<vmem>>, vector<1x4x256xf32>
    %38 = vector.shape_cast %37 : vector<1x4x256xf32> to vector<4x256xf32>
    %39 = vector.broadcast %32 : vector<4x1xf32> to vector<4x256xf32>
    %40 = arith.mulf %38, %39 : vector<4x256xf32>
    %41 = vector.broadcast %35 : vector<4x1xf32> to vector<4x256xf32>
    %42 = arith.addf %40, %41 : vector<4x256xf32>
    %cst_22 = arith.constant 0.000000e+00 : f32
    %43 = vector.broadcast %cst_22 : f32 to vector<4x256xf32>
    %44 = arith.cmpf oge, %42, %43 : vector<4x256xf32>
    %45 = vector.broadcast %36 : vector<4x1xf32> to vector<4x256xf32>
    %46 = arith.mulf %45, %42 : vector<4x256xf32>
    %47 = arith.select %44, %42, %46 : vector<4x256xi1>, vector<4x256xf32>
    %c0_23 = arith.constant 0 : index
    %c0_24 = arith.constant 0 : index
    %c0_25 = arith.constant 0 : index
    %48 = vector.load %arg4[%c0_23, %c0_24, %c0_25] : memref<2x4x256xf32, #tpu.memory_space<vmem>>, vector<1x4x256xf32>
    %49 = vector.shape_cast %48 : vector<1x4x256xf32> to vector<4x256xf32>
    %50 = vector.shape_cast %47 : vector<4x256xf32> to vector<1x4x256xf32>
    tpu.vector_store %arg4[%c0_23, %c0_24, %c0_25], %50 {strides = array<i32>} : memref<2x4x256xf32, #tpu.memory_space<vmem>>, vector<1x4x256xf32>,
    %c1_26 = arith.constant 1 : index
    %c0_27 = arith.constant 0 : index
    %c0_28 = arith.constant 0 : index
    %51 = vector.load %arg0[%c1_26, %c0_27, %c0_28] : memref<2x4x256xf32, #tpu.memory_space<vmem>>, vector<1x4x256xf32>
    %52 = vector.shape_cast %51 : vector<1x4x256xf32> to vector<4x256xf32>
    %53 = vector.broadcast %32 : vector<4x1xf32> to vector<4x256xf32>
    %54 = arith.mulf %52, %53 : vector<4x256xf32>
    %55 = vector.broadcast %35 : vector<4x1xf32> to vector<4x256xf32>
    %56 = arith.addf %54, %55 : vector<4x256xf32>
    %cst_29 = arith.constant 0.000000e+00 : f32
    %57 = vector.broadcast %cst_29 : f32 to vector<4x256xf32>
    %58 = arith.cmpf oge, %56, %57 : vector<4x256xf32>
    %59 = vector.broadcast %36 : vector<4x1xf32> to vector<4x256xf32>
    %60 = arith.mulf %59, %56 : vector<4x256xf32>
    %61 = arith.select %58, %56, %60 : vector<4x256xi1>, vector<4x256xf32>
    %c1_30 = arith.constant 1 : index
    %c0_31 = arith.constant 0 : index
    %c0_32 = arith.constant 0 : index
    %62 = vector.load %arg4[%c1_30, %c0_31, %c0_32] : memref<2x4x256xf32, #tpu.memory_space<vmem>>, vector<1x4x256xf32>
    %63 = vector.shape_cast %62 : vector<1x4x256xf32> to vector<4x256xf32>
    %64 = vector.shape_cast %61 : vector<4x256xf32> to vector<1x4x256xf32>
    tpu.vector_store %arg4[%c1_30, %c0_31, %c0_32], %64 {strides = array<i32>} : memref<2x4x256xf32, #tpu.memory_space<vmem>>, vector<1x4x256xf32>,
    return
  }
}

</mosaic_0001>

<llo_original>
// kernel: bn_prelu.1
$region0: #{bn_prelu.1}
  #allocation0 [shape = 'u32[]', space=smem, size = 0x4, offset = 0x4, fixed_abs, tag = 'smem constant byte address 0x4 - core index']
  #allocation1 [shape = 'u32[72,128]{1,0:T(1,128)}', space=vmem, size = 0x9000, scoped, tag = 'internal scratch']
  %s0 = inlined_call_operand.vmem [shape: f32[2,4,256], index: 0, kind: input, shape index: {}]
  %s1 = inlined_call_operand.vmem [shape: f32[4,1], index: 1, kind: input, shape index: {}]
  %s2 = inlined_call_operand.vmem [shape: f32[4,1], index: 2, kind: input, shape index: {}]
  %s3 = inlined_call_operand.vmem [shape: f32[4,1], index: 3, kind: input, shape index: {}]
  %s4 = inlined_call_operand.vmem [shape: f32[2,4,256], index: 4, kind: output, shape index: {}]
  %s5 = sld [smem:[#allocation0]]
  $region26: #{bn_prelu.1} parent=0
    _
  %s7 = ssub.s32 1, %s5
  %s8 = scalar_select 0, %s7, %s5
  // Predicated region
  $region2: #{bn_prelu.1} parent=0 // pred_check
    _
  $region3: #{bn_prelu.1} parent=0 // pred_check_branch
    %10 = sbr.rel (0) target = $region5
  $region4: #{bn_prelu.1} parent=0 // pred_region
    _
  $region5: #{bn_prelu.1} parent=0 // pred_fallthru
    _
  // Predicated region
  $region6: #{bn_prelu.1} parent=0 // pred_check
    _
  $region7: #{bn_prelu.1} parent=0 // pred_check_branch
    %12 = sbr.rel (0) target = $region9
  $region8: #{bn_prelu.1} parent=0 // pred_region
    _
  $region9: #{bn_prelu.1} parent=0 // pred_fallthru
    _
  // Predicated region
  $region10: #{bn_prelu.1} parent=0 // pred_check
    _
  $region11: #{bn_prelu.1} parent=0 // pred_check_branch
    %14 = sbr.rel (0) target = $region13
  $region12: #{bn_prelu.1} parent=0 // pred_region
    _
  $region13: #{bn_prelu.1} parent=0 // pred_fallthru
    _
  // Predicated region
  $region14: #{bn_prelu.1} parent=0 // pred_check
    _
  $region15: #{bn_prelu.1} parent=0 // pred_check_branch
    %16 = sbr.rel (0) target = $region17
  $region16: #{bn_prelu.1} parent=0 // pred_region
    _
  $region17: #{bn_prelu.1} parent=0 // pred_fallthru
    _
  %v17 = vld [vmem:[%s0] sm:$0xff]
  %19 = vst [vmem:[#allocation1] ss:$2 sm:$0xff] %v17
  %v20 = vld.sshfl [vmem:[#allocation1] sm:$0xff pattern:$0x75316420]
  %v21 = vld.sshfl [vmem:[#allocation1 + $0x8] sm:$0xff pattern:$0x75316420]
  %vm24 = vcmask 1043456
  %v25 = vsel %vm24, %v20, 0.0
  %v26 = vsel %vm24, %v21, 0.0
  %v27 = vadd.f32 %v25, %v26
  %28 = vadd.xlane.f32.xlu0 %v27
  %v29 = vpop.xlane.xlu0 %28
  %v30 = vadd.f32 %v29, 0.0
  %v31 = vmul.f32 %v17, %v17
  %33 = vst [vmem:[#allocation1] ss:$2 sm:$0xff] %v31
  %v34 = vld.sshfl [vmem:[#allocation1] sm:$0xff pattern:$0x75316420]
  %v35 = vld.sshfl [vmem:[#allocation1 + $0x8] sm:$0xff pattern:$0x75316420]
  %v38 = vsel %vm24, %v34, 0.0
  %v39 = vsel %vm24, %v35, 0.0
  %v40 = vadd.f32 %v38, %v39
  %41 = vadd.xlane.f32.xlu0 %v40
  %v42 = vpop.xlane.xlu0 %41
  %v43 = vadd.f32 %v42, 0.0
  %s44 = scalar_lea.vmem %s0, 8
  %v45 = vld [vmem:[%s44] sm:$0xff]
  %47 = vst [vmem:[#allocation1] ss:$2 sm:$0xff] %v45
  %v48 = vld.sshfl [vmem:[#allocation1] sm:$0xff pattern:$0x75316420]
  %v49 = vld.sshfl [vmem:[#allocation1 + $0x8] sm:$0xff pattern:$0x75316420]
  %v52 = vsel %vm24, %v48, 0.0
  %v53 = vsel %vm24, %v49, 0.0
  %v54 = vadd.f32 %v52, %v53
  %55 = vadd.xlane.f32.xlu0 %v54
  %v56 = vpop.xlane.xlu0 %55
  %v57 = vadd.f32 %v30, %v56
  %v58 = vmul.f32 %v45, %v45
  %60 = vst [vmem:[#allocation1] ss:$2 sm:$0xff] %v58
  %v61 = vld.sshfl [vmem:[#allocation1] sm:$0xff pattern:$0x75316420]
  %v62 = vld.sshfl [vmem:[#allocation1 + $0x8] sm:$0xff pattern:$0x75316420]
  %v65 = vsel %vm24, %v61, 0.0
  %v66 = vsel %vm24, %v62, 0.0
  %v67 = vadd.f32 %v65, %v66
  %68 = vadd.xlane.f32.xlu0 %v67
  %v69 = vpop.xlane.xlu0 %68
  %v70 = vadd.f32 %v43, %v69
  %v71 = vmul.f32 %v57, 0.001953125
  %v72 = vmul.f32 %v70, 0.001953125
  %v73 = vmul.f32 %v71, %v71
  %v74 = vsub.f32 %v72, %v73
  %v75 = vmax.f32 %v74, 0.0
  %v76 = vld [vmem:[%s1] sm:$0xf]
  %v77 = vadd.f32 %v75, 0.001
  %v78 = vrsqrt.pop %v77
  %v79 = vmul.f32 %v78, %v77
  %v80 = vmul.f32 %v79, %v78
  %v81 = vmul.f32 0.5, %v80
  %v82 = vsub.f32 1.5, %v81
  %v83 = vmul.f32 %v78, %v82
  %vm84 = vweird.f32 %v77
  %vm85 = vweird.f32 %v78
  %vm86 = vmor %vm84, %vm85
  %v87 = vsel %vm86, %v78, %v83
  %v88 = vmul.f32 %v76, %v87
  %v89 = vld [vmem:[%s2] sm:$0xf]
  %v90 = vmul.f32 %v71, %v88
  %v91 = vsub.f32 %v89, %v90
  %v92 = vld [vmem:[%s3] sm:$0xf]
  %94 = vset.pattern.permute.xlu0 0
  %95 = vperm.xlu0 %94, %v88
  %v96 = vpop.permute.xlu0 %95
  %v98 = vunpack.c.l.s4 839922192
  %v99 = vunpack.c.0.s8 %v98
  %v100 = vperm.slane %v96, %v99
  %v102 = vmul.f32 %v17, %v100
  %104 = vset.pattern.permute.xlu0 0
  %105 = vperm.xlu0 %104, %v91
  %v106 = vpop.permute.xlu0 %105
  %v108 = vunpack.c.l.s4 839922192
  %v109 = vunpack.c.0.s8 %v108
  %v110 = vperm.slane %v106, %v109
  %v112 = vadd.f32 %v102, %v110
  %vm113 = vcmp.ge.f32.partialorder %v112, 0.0
  %115 = vset.pattern.permute.xlu0 0
  %116 = vperm.xlu0 %115, %v92
  %v117 = vpop.permute.xlu0 %116
  %120 = vst [vmem:[#allocation1] ss:$2 sm:$0xff] %v112
  %v121 = vld.sshfl [vmem:[#allocation1] sm:$0xff pattern:$0x75316420]
  %v122 = vld.sshfl [vmem:[#allocation1 + $0x8] sm:$0xff pattern:$0x75316420]
  %v125 = vmul.f32 %v117, %v121
  %v126 = vmul.f32 %v117, %v122
  %v129 = vrot.slane %v126, 4
  %v130 = vsel %vm24, %v125, %v129
  %v132 = vsel %vm113, %v112, %v130
  %133 = vst [vmem:[%s4] sm:$0xff] %v132
  %v134 = vld [vmem:[%s44] sm:$0xff]
  %v135 = vmul.f32 %v134, %v100
  %v136 = vadd.f32 %v135, %v110
  %vm137 = vcmp.ge.f32.partialorder %v136, 0.0
  %139 = vst [vmem:[#allocation1] ss:$2 sm:$0xff] %v136
  %v140 = vld.sshfl [vmem:[#allocation1] sm:$0xff pattern:$0x75316420]
  %v141 = vld.sshfl [vmem:[#allocation1 + $0x8] sm:$0xff pattern:$0x75316420]
  %v144 = vmul.f32 %v117, %v140
  %v145 = vmul.f32 %v117, %v141
  %v148 = vrot.slane %v145, 4
  %v149 = vsel %vm24, %v144, %v148
  %v151 = vsel %vm137, %v136, %v149
  %s152 = scalar_lea.vmem %s4, 8
  %153 = vst [vmem:[%s152] sm:$0xff] %v151
  // Predicated region
  $region18: #{bn_prelu.1} parent=0 // pred_check
    _
  $region19: #{bn_prelu.1} parent=0 // pred_check_branch
    %155 = sbr.rel (0) target = $region21
  $region20: #{bn_prelu.1} parent=0 // pred_region
    _
  $region21: #{bn_prelu.1} parent=0 // pred_fallthru
    _
  // Predicated region
  $region22: #{bn_prelu.1} parent=0 // pred_check
    _
  $region23: #{bn_prelu.1} parent=0 // pred_check_branch
    %157 = sbr.rel (0) target = $region25
  $region24: #{bn_prelu.1} parent=0 // pred_region
    _
  $region25: #{bn_prelu.1} parent=0 // pred_fallthru
    _

</llo_original>
